<compile_context>
chip_gen: v5e
topology: v5e:2x2
jax: 0.10.0
libtpu: 0.0.40
codegen_flags: <defaults>
</compile_context>

<pallas_src>
import functools

import jax
import jax.numpy as jnp
from jax import lax
from jax.experimental import pallas as pl
from jax.experimental.pallas import tpu as pltpu


def _round_up(x, m):
    return ((x + m - 1) // m) * m


def _pad_feature(d):
    # >128 features: pad to a multiple of 256 so the matmul N-dim fills the
    # 2x256x256 MXU on v6e/v7x; <=128: a single full lane group.
    return 128 if d <= 128 else _round_up(d, 256)


def _vmem_capacity_bytes():
    try:
        return int(pltpu.get_tpu_info().vmem_capacity_bytes)
    except Exception:
        return 64 * 1024 * 1024  # conservative fallback (v7x per-core VMEM)


def _vmem_limit(need_bytes):
    cap = int(0.8 * _vmem_capacity_bytes())  # headroom for pipeline buffers
    return min(max(int(need_bytes) + (4 << 20), 16 << 20), cap)


# ---------------------------------------------------------------------------
# Kernel 1: feature projection  XW = X @ W   (bf16 MXU, f32 accumulate)
# grid = (n_pad // tm,)
# ---------------------------------------------------------------------------
def _project_kernel(x_ref, w_ref, out_ref):
    out_ref[...] = jnp.dot(
        x_ref[...], w_ref[...],
        preferred_element_type=jnp.float32,
        precision=lax.Precision.DEFAULT,
    ).astype(out_ref.dtype)


def _project(x_p, w_p, *, tm, out_dtype):
    n_pad, fin_p = x_p.shape
    fout_p = w_p.shape[1]
    x_it = jnp.dtype(x_p.dtype).itemsize
    w_it = jnp.dtype(w_p.dtype).itemsize
    o_it = jnp.dtype(out_dtype).itemsize

    need = (2 * tm * fin_p * x_it          # X tiles (double-buffered)
            + 2 * fin_p * fout_p * w_it    # W (constant index)
            + 2 * tm * fout_p * o_it)      # out tiles
    cost = pl.CostEstimate(
        flops=2 * n_pad * fin_p * fout_p,
        transcendentals=0,
        bytes_accessed=(n_pad * fin_p * x_it + fin_p * fout_p * w_it
                        + n_pad * fout_p * o_it),
    )
    return pl.pallas_call(
        _project_kernel,
        out_shape=jax.ShapeDtypeStruct((n_pad, fout_p), out_dtype),
        grid_spec=pltpu.PrefetchScalarGridSpec(
            num_scalar_prefetch=0,
            grid=(n_pad // tm,),
            in_specs=[
                pl.BlockSpec((tm, fin_p), lambda i: (i, 0)),        # X rows
                pl.BlockSpec((fin_p, fout_p), lambda i: (0, 0)),    # W (full)
            ],
            out_specs=pl.BlockSpec((tm, fout_p), lambda i: (i, 0)),
        ),
        compiler_params=pltpu.CompilerParams(
            dimension_semantics=("parallel",),
            vmem_limit_bytes=_vmem_limit(need),
        ),
        cost_estimate=cost,
    )(x_p, w_p)


# ---------------------------------------------------------------------------
# Kernel 2: aggregation  OUT = relu?(A @ XW + b)
# grid = (n_pad // tm, n_pad // tk); reduction (neighbor) axis last.
# ---------------------------------------------------------------------------
def _aggregate_kernel(a_ref, xw_ref, b_ref, out_ref, acc_ref, *,
                      tk, apply_relu, xw_resident):
    k = pl.program_id(1)

    @pl.when(k == 0)
    def _init():
        acc_ref[...] = jnp.zeros_like(acc_ref)

    if xw_resident:
        # XW is VMEM-resident (fetched once); slice the current K window.
        start = pl.multiple_of(k * tk, 128)
        xw = xw_ref[pl.ds(start, tk), :]
    else:
        xw = xw_ref[...]

    acc_ref[...] += jnp.dot(a_ref[...], xw,
                            preferred_element_type=jnp.float32,
                            precision=lax.Precision.DEFAULT)

    @pl.when(k == pl.num_programs(1) - 1)
    def _finalize():
        h = acc_ref[...] + b_ref[...]
        if apply_relu:
            h = jnp.maximum(h, 0.0)
        out_ref[...] = h.astype(out_ref.dtype)


def _aggregate(a_p, xw_p, b_p, *, out_dtype, apply_relu, tm, tk):
    n_pad = a_p.shape[0]
    fout_p = xw_p.shape[1]
    a_it = jnp.dtype(a_p.dtype).itemsize
    x_it = jnp.dtype(xw_p.dtype).itemsize
    o_it = jnp.dtype(out_dtype).itemsize

    cap = _vmem_capacity_bytes()
    xw_resident_bytes = 2 * n_pad * fout_p * x_it
    xw_resident = xw_resident_bytes <= cap // 4

    grid = (n_pad // tm, n_pad // tk)

    if xw_resident:
        xw_spec = pl.BlockSpec((n_pad, fout_p), lambda i, k: (0, 0))
        xw_need = xw_resident_bytes
        xw_hbm_reads = 1
    else:
        xw_spec = pl.BlockSpec((tk, fout_p), lambda i, k: (k, 0))
        xw_need = 2 * tk * fout_p * x_it
        xw_hbm_reads = grid[0]

    need = (2 * tm * tk * a_it             # A tiles (double-buffered)
            + xw_need                      # projected features
            + 2 * fout_p * 4               # bias
            + 2 * tm * fout_p * o_it       # output tiles
            + tm * fout_p * 4)             # f32 accumulator scratch
    cost = pl.CostEstimate(
        flops=2 * n_pad * n_pad * fout_p,
        transcendentals=0,
        bytes_accessed=(n_pad * n_pad * a_it
                        + xw_hbm_reads * n_pad * fout_p * x_it
                        + fout_p * 4
                        + n_pad * fout_p * o_it),
    )

    kernel = functools.partial(_aggregate_kernel, tk=tk,
                               apply_relu=apply_relu, xw_resident=xw_resident)
    return pl.pallas_call(
        kernel,
        out_shape=jax.ShapeDtypeStruct((n_pad, fout_p), out_dtype),
        grid_spec=pltpu.PrefetchScalarGridSpec(
            num_scalar_prefetch=0,
            grid=grid,
            in_specs=[
                pl.BlockSpec((tm, tk), lambda i, k: (i, k)),       # A_hat tile
                xw_spec,                                           # XW
                pl.BlockSpec((1, fout_p), lambda i, k: (0, 0)),    # bias
            ],
            out_specs=pl.BlockSpec((tm, fout_p), lambda i, k: (i, 0)),
            scratch_shapes=[pltpu.VMEM((tm, fout_p), jnp.float32)],
        ),
        compiler_params=pltpu.CompilerParams(
            dimension_semantics=("parallel", "arbitrary"),
            vmem_limit_bytes=_vmem_limit(need),
        ),
        cost_estimate=cost,
    )(a_p, xw_p, b_p)


# ---------------------------------------------------------------------------
# 2-layer GCN forward
# ---------------------------------------------------------------------------
def gcn_forward(a_hat, x, w1, b1, w2, b2, *, tm=512, tk=1024,
                compute_dtype=jnp.bfloat16):
    """2-layer GCN forward.

    A_hat, X, the weights and the inter-layer H1 are quantized to
    `compute_dtype` (bf16 by default) for the MXU; all accumulation is f32 and
    bias/ReLU epilogues run in f32.  Pass compute_dtype=jnp.float32 for full
    fp32 fidelity (slower: multi-pass MXU emulation).
    """
    n = a_hat.shape[0]
    fin, hid = w1.shape
    ncls = w2.shape[1]

    # Tile plan. Invariant: tm | tk | n_pad  (fixes the row-coverage bug), and
    # with the default tk == 2*tm the "parallel" row axis has an even number
    # of tiles for v7x's 2 TensorCores.
    n128 = _round_up(n, 128)
    tm = max(128, min(tm, n128))
    tk = _round_up(max(tm, min(tk, n128)), tm)
    n_pad = _round_up(n, tk)

    fin_p = _pad_feature(fin)
    hid_p = _pad_feature(hid)
    cls_p = _pad_feature(ncls)

    cdt = compute_dtype
    # Zero-pad once; padded rows/cols are zero so valid outputs are untouched.
    a_p = jnp.zeros((n_pad, n_pad), cdt).at[:n, :n].set(a_hat.astype(cdt))
    x_p = jnp.zeros((n_pad, fin_p), cdt).at[:n, :fin].set(x.astype(cdt))
    w1_p = jnp.zeros((fin_p, hid_p), cdt).at[:fin, :hid].set(w1.astype(cdt))
    w2_p = jnp.zeros((hid_p, cls_p), cdt).at[:hid, :ncls].set(w2.astype(cdt))
    b1_p = jnp.zeros((1, hid_p), jnp.float32).at[:, :hid].set(
        b1.reshape(1, -1).astype(jnp.float32))
    b2_p = jnp.zeros((1, cls_p), jnp.float32).at[:, :ncls].set(
        b2.reshape(1, -1).astype(jnp.float32))

    # Layer 1: project then aggregate; emit H1 directly in compute_dtype.
    xw1 = _project(x_p, w1_p, tm=tm, out_dtype=cdt)
    h1_p = _aggregate(a_p, xw1, b1_p, out_dtype=cdt, apply_relu=True,
                      tm=tm, tk=tk)

    # Layer 2: consumes H1 straight from HBM, emits f32 logits.
    xw2 = _project(h1_p, w2_p, tm=tm, out_dtype=cdt)
    out_p = _aggregate(a_p, xw2, b2_p, out_dtype=jnp.float32, apply_relu=False,
                       tm=tm, tk=tk)
    return out_p[:n, :ncls]


# ---------------------------------------------------------------------------
# Glue: dense normalized adjacency from edge_index (plain JAX)
# ---------------------------------------------------------------------------
def normalized_adjacency(edge_index, num_nodes):
    src, dst = edge_index[0], edge_index[1]
    # Duplicate edges sum (matches PyG scatter-add of unit edge weights).
    adj = jnp.zeros((num_nodes, num_nodes), jnp.float32).at[dst, src].add(1.0)
    # Add self-loops only where missing (matches add_remaining_self_loops).
    diag = jnp.diagonal(adj)
    adj = adj + jnp.diag(jnp.where(diag > 0, 0.0, 1.0))
    deg = adj.sum(axis=1)
    d = jnp.where(deg > 0, jax.lax.rsqrt(deg), 0.0)
    return d[:, None] * adj * d[None, :]


# ---------------------------------------------------------------------------
# Deterministic parameter init (glorot-uniform-ish, zero bias)
# ---------------------------------------------------------------------------
def init_params(key, input_dim, hidden_dim, num_classes):
    k1, k2 = jax.random.split(key)
    lim1 = (6.0 / (input_dim + hidden_dim)) ** 0.5
    lim2 = (6.0 / (hidden_dim + num_classes)) ** 0.5
    w1 = jax.random.uniform(k1, (input_dim, hidden_dim), jnp.float32, -lim1, lim1)
    w2 = jax.random.uniform(k2, (hidden_dim, num_classes), jnp.float32, -lim2, lim2)
    b1 = jnp.zeros((1, hidden_dim), jnp.float32)
    b2 = jnp.zeros((1, num_classes), jnp.float32)
    return w1, b1, w2, b2


if __name__ == "__main__":
    key = jax.random.PRNGKey(0)
    kx, kp = jax.random.split(key)

    # Small, module-consistent shapes
    num_nodes = 16
    input_dim = 8
    hidden_dim = 32
    num_classes = 4

    # Node features
    x = jax.random.normal(kx, (num_nodes, input_dim), dtype=jnp.float32)

    # Deterministic edge_index: bidirectional ring graph -> shape [2, 32]
    idx = jnp.arange(num_nodes)
    src = jnp.concatenate([idx, (idx + 1) % num_nodes])
    dst = jnp.concatenate([(idx + 1) % num_nodes, idx])
    edge_index = jnp.stack([src, dst], axis=0).astype(jnp.int32)

    # Parameters
    w1, b1, w2, b2 = init_params(kp, input_dim, hidden_dim, num_classes)

    # Dense normalized adjacency (glue, plain JAX)
    a_hat = normalized_adjacency(edge_index, num_nodes)

    # Run tiled Pallas GCN forward
    out = gcn_forward(a_hat, x, w1, b1, w2, b2)
    out = jax.block_until_ready(out)

    # Reference mirroring the kernel numerics:
    #   bf16 MXU inputs, f32 accumulation, f32 bias/relu, bf16 inter-layer.
    bf = jnp.bfloat16
    a_b = a_hat.astype(bf)
    xw1_r = jnp.dot(x.astype(bf), w1.astype(bf),
                    preferred_element_type=jnp.float32).astype(bf)
    h1_r = jnp.maximum(jnp.dot(a_b, xw1_r, preferred_element_type=jnp.float32)
                       + b1, 0.0).astype(bf)
    xw2_r = jnp.dot(h1_r, w2.astype(bf),
                    preferred_element_type=jnp.float32).astype(bf)
    out_ref = jnp.dot(a_b, xw2_r, preferred_element_type=jnp.float32) + b2

    assert out.shape == (num_nodes, num_classes)
    assert jnp.allclose(out, out_ref, atol=5e-3, rtol=5e-3), float(
        jnp.max(jnp.abs(out - out_ref)))

    print("KERNEL_OK")
</pallas_src>

<mosaic_0001>
module attributes {stable_mosaic.version = 11 : i64} {
  func.func @_project_kernel(%arg0: i32, %arg1: memref<128x128xbf16, #tpu.memory_space<vmem>>, %arg2: memref<128x128xbf16, #tpu.memory_space<vmem>>, %arg3: memref<128x128xbf16, #tpu.memory_space<vmem>>) attributes {dimension_semantics = [#tpu.dimension_semantics<parallel>], iteration_bounds = array<i64: 1>, scalar_prefetch = 0 : i64, scratch_operands = 0 : i64, tpu.core_type = #tpu.core_type<tc>, window_params = [{transform_indices = @transform_0, window_bounds = array<i64: 128, 128>}, {pipeline_mode = #tpu.pipeline_mode<synchronous>, transform_indices = @transform_1, window_bounds = array<i64: 128, 128>}, {transform_indices = @transform_2, window_bounds = array<i64: 128, 128>}]} {
    %c0 = arith.constant 0 : index
    %c0_0 = arith.constant 0 : index
    %0 = vector.load %arg1[%c0, %c0_0] : memref<128x128xbf16, #tpu.memory_space<vmem>>, vector<128x128xbf16>
    %c0_1 = arith.constant 0 : index
    %c0_2 = arith.constant 0 : index
    %1 = vector.load %arg2[%c0_1, %c0_2] : memref<128x128xbf16, #tpu.memory_space<vmem>>, vector<128x128xbf16>
    %cst = arith.constant dense<0.000000e+00> : vector<128x128xf32>
    %2 = tpu.matmul %0, %1, %cst {dimension_numbers = #tpu.dot_dimension_numbers<[1], [0], [0], [1], [0, 0, 1, 1], [], []>} : vector<128x128xbf16>, vector<128x128xbf16>, vector<128x128xf32> -> vector<128x128xf32>
    %3 = arith.truncf %2 : vector<128x128xf32> to vector<128x128xbf16>
    %c0_3 = arith.constant 0 : index
    %c0_4 = arith.constant 0 : index
    %4 = vector.load %arg3[%c0_3, %c0_4] : memref<128x128xbf16, #tpu.memory_space<vmem>>, vector<128x128xbf16>
    tpu.vector_store %arg3[%c0_3, %c0_4], %3 {strides = array<i32>} : memref<128x128xbf16, #tpu.memory_space<vmem>>, vector<128x128xbf16>,
    return
  }
  func.func @transform_0(%arg0: i32) -> (i32, i32) {
    %c0_i32 = arith.constant 0 : i32
    %c0_i32_0 = arith.constant 0 : i32
    return %arg0, %c0_i32 : i32, i32
  }
  func.func @transform_1(%arg0: i32) -> (i32, i32) {
    %c0_i32 = arith.constant 0 : i32
    %c0_i32_0 = arith.constant 0 : i32
    %c0_i32_1 = arith.constant 0 : i32
    return %c0_i32, %c0_i32_0 : i32, i32
  }
  func.func @transform_2(%arg0: i32) -> (i32, i32) {
    %c0_i32 = arith.constant 0 : i32
    %c0_i32_0 = arith.constant 0 : i32
    return %arg0, %c0_i32 : i32, i32
  }
}

</mosaic_0001>

<llo_original>
// kernel: tpu_custom_call.1
$region0: #{tpu_custom_call.1}
  #allocation0 [shape = 'u32[]', space=smem, size = 0x4, offset = 0x4, fixed_abs, tag = 'smem constant byte address 0x4 - core index']
  #allocation1 [shape = 'u32[72,128]{1,0:T(1,128)}', space=vmem, size = 0x9000, scoped, tag = 'internal scratch']
  %s0 = inlined_call_operand.hbm [shape: bf16[128,128], index: 0, kind: input, shape index: {}]
  %s1 = inlined_call_operand.hbm [shape: bf16[128,128], index: 1, kind: input, shape index: {}]
  %s2 = inlined_call_operand.hbm [shape: bf16[128,128], index: 2, kind: output, shape index: {}]
  %s3 = sld [smem:[#allocation0]]
  $region26: #{tpu_custom_call.1} parent=0
    _
  %s5 = ssub.s32 1, %s3
  %s6 = scalar_select 0, %s5, %s3
  $region1: #{tpu_custom_call.1} parent=0
    #allocation2 [shape = 'u8[32768]{0}', space=vmem, size = 0x8000, scoped, tag = 'input window, operand 0, single buffered']
    #allocation3 [shape = 's32[1]{0}', space=sflag, size = 0x4, scoped, tag = 'scoped memory for tpu_custom_call.1']
    #allocation4 [shape = 's32[1]{0}', space=sflag, size = 0x4, scoped, tag = 'scoped memory for tpu_custom_call.1']
    #allocation5 [shape = 'u8[32768]{0}', space=vmem, size = 0x8000, scoped, tag = 'input window, operand 1, single buffered']
    #allocation6 [shape = 's32[1]{0}', space=sflag, size = 0x4, scoped, tag = 'scoped memory for tpu_custom_call.1']
    #allocation7 [shape = 'u8[32768]{0}', space=vmem, size = 0x8000, scoped, tag = 'output window, operand 0, single buffered']
    %7 = vsyncpa [#allocation3], 0
    %8 = vsyncpa [#allocation6], 0
    %9 = vsyncpa [#allocation4], 0
    // Predicated region
    $region2: #{tpu_custom_call.1} parent=1 // pred_check
      _
    $region3: #{tpu_custom_call.1} parent=1 // pred_check_branch
      %11 = sbr.rel (0) target = $region5
    $region4: #{tpu_custom_call.1} parent=1 // pred_region
      %13 = vsyncadd [#allocation3], 0
      %s14 = sshll.u32 %s0, 4
      %s15 = int_to_ptr.hbm [resolvable:$true] %s14
      %s16 = sshll.u32 [#allocation2], 4
      %s17 = int_to_ptr.vmem [resolvable:$true] %s16
      %22 = dma.hbm_to_vmem [thread:$0]  %s15, 1024, %s17, [#allocation3], 64, 64, 4
    $region5: #{tpu_custom_call.1} parent=1 // pred_fallthru
      _
    // Predicated region
    $region6: #{tpu_custom_call.1} parent=1 // pred_check
      _
    $region7: #{tpu_custom_call.1} parent=1 // pred_check_branch
      %24 = sbr.rel (0) target = $region9
    $region8: #{tpu_custom_call.1} parent=1 // pred_region
      %26 = vsyncadd [#allocation6], 0
      %s27 = sshll.u32 %s1, 4
      %s28 = int_to_ptr.hbm [resolvable:$true] %s27
      %s29 = sshll.u32 [#allocation5], 4
      %s30 = int_to_ptr.vmem [resolvable:$true] %s29
      %35 = dma.hbm_to_vmem [thread:$0]  %s28, 1024, %s30, [#allocation6], 64, 64, 4
    $region9: #{tpu_custom_call.1} parent=1 // pred_fallthru
      _
    // Predicated region
    $region10: #{tpu_custom_call.1} parent=1 // pred_check
      _
    $region11: #{tpu_custom_call.1} parent=1 // pred_check_branch
      %37 = sbr.rel (0) target = $region13
    $region12: #{tpu_custom_call.1} parent=1 // pred_region
      %39 = dma.done [#allocation3], 1024
    $region13: #{tpu_custom_call.1} parent=1 // pred_fallthru
      _
    // Predicated region
    $region14: #{tpu_custom_call.1} parent=1 // pred_check
      _
    $region15: #{tpu_custom_call.1} parent=1 // pred_check_branch
      %41 = sbr.rel (0) target = $region17
    $region16: #{tpu_custom_call.1} parent=1 // pred_region
      %43 = dma.done [#allocation6], 1024
    $region17: #{tpu_custom_call.1} parent=1 // pred_fallthru
      _
    %v44 = vld [vmem:[#allocation2] sm:$0xf]
    %v45 = vld [vmem:[#allocation2 + $0x4] sm:$0xf]
    %v46 = vld [vmem:[#allocation2 + $0x8] sm:$0xf]
    %v47 = vld [vmem:[#allocation2 + $0xc] sm:$0xf]
    %v48 = vld [vmem:[#allocation2 + $0x10] sm:$0xf]
    %v49 = vld [vmem:[#allocation2 + $0x14] sm:$0xf]
    %v50 = vld [vmem:[#allocation2 + $0x18] sm:$0xf]
    %v51 = vld [vmem:[#allocation2 + $0x1c] sm:$0xf]
    %v52 = vld [vmem:[#allocation2 + $0x20] sm:$0xf]
    %v53 = vld [vmem:[#allocation2 + $0x24] sm:$0xf]
    %v54 = vld [vmem:[#allocation2 + $0x28] sm:$0xf]
    %v55 = vld [vmem:[#allocation2 + $0x2c] sm:$0xf]
    %v56 = vld [vmem:[#allocation2 + $0x30] sm:$0xf]
    %v57 = vld [vmem:[#allocation2 + $0x34] sm:$0xf]
    %v58 = vld [vmem:[#allocation2 + $0x38] sm:$0xf]
    %v59 = vld [vmem:[#allocation2 + $0x3c] sm:$0xf]
    %v60 = vld [vmem:[#allocation5] sm:$0xf]
    %v61 = vld [vmem:[#allocation5 + $0x4] sm:$0xf]
    %v62 = vld [vmem:[#allocation5 + $0x8] sm:$0xf]
    %v63 = vld [vmem:[#allocation5 + $0xc] sm:$0xf]
    %v64 = vld [vmem:[#allocation5 + $0x10] sm:$0xf]
    %v65 = vld [vmem:[#allocation5 + $0x14] sm:$0xf]
    %v66 = vld [vmem:[#allocation5 + $0x18] sm:$0xf]
    %v67 = vld [vmem:[#allocation5 + $0x1c] sm:$0xf]
    %v68 = vld [vmem:[#allocation5 + $0x20] sm:$0xf]
    %v69 = vld [vmem:[#allocation5 + $0x24] sm:$0xf]
    %v70 = vld [vmem:[#allocation5 + $0x28] sm:$0xf]
    %v71 = vld [vmem:[#allocation5 + $0x2c] sm:$0xf]
    %v72 = vld [vmem:[#allocation5 + $0x30] sm:$0xf]
    %v73 = vld [vmem:[#allocation5 + $0x34] sm:$0xf]
    %v74 = vld [vmem:[#allocation5 + $0x38] sm:$0xf]
    %v75 = vld [vmem:[#allocation5 + $0x3c] sm:$0xf]
    %v92 = vunpack.c.l.b16 %v44
    %v93 = vunpack.c.l.b16 %v45
    %v94 = vunpack.c.l.b16 %v46
    %v95 = vunpack.c.l.b16 %v47
    %v96 = vunpack.c.l.b16 %v48
    %v97 = vunpack.c.l.b16 %v49
    %v98 = vunpack.c.l.b16 %v50
    %v99 = vunpack.c.l.b16 %v51
    %v100 = vunpack.c.l.b16 %v52
    %v101 = vunpack.c.l.b16 %v53
    %v102 = vunpack.c.l.b16 %v54
    %v103 = vunpack.c.l.b16 %v55
    %v104 = vunpack.c.l.b16 %v56
    %v105 = vunpack.c.l.b16 %v57
    %v106 = vunpack.c.l.b16 %v58
    %v107 = vunpack.c.l.b16 %v59
    %v108 = vpack.c.b16 %v93, %v92
    %v109 = vpack.c.b16 %v95, %v94
    %v110 = vpack.c.b16 %v97, %v96
    %v111 = vpack.c.b16 %v99, %v98
    %v112 = vpack.c.b16 %v101, %v100
    %v113 = vpack.c.b16 %v103, %v102
    %v114 = vpack.c.b16 %v105, %v104
    %v115 = vpack.c.b16 %v107, %v106
    %v140 = vunpack.c.l.b16 %v60
    %v141 = vunpack.c.l.b16 %v61
    %v142 = vunpack.c.l.b16 %v62
    %v143 = vunpack.c.l.b16 %v63
    %v144 = vunpack.c.l.b16 %v64
    %v145 = vunpack.c.l.b16 %v65
    %v146 = vunpack.c.l.b16 %v66
    %v147 = vunpack.c.l.b16 %v67
    %v148 = vunpack.c.l.b16 %v68
    %v149 = vunpack.c.l.b16 %v69
    %v150 = vunpack.c.l.b16 %v70
    %v151 = vunpack.c.l.b16 %v71
    %v152 = vunpack.c.l.b16 %v72
    %v153 = vunpack.c.l.b16 %v73
    %v154 = vunpack.c.l.b16 %v74
    %v155 = vunpack.c.l.b16 %v75
    %v156 = vpack.c.b16 %v141, %v140
    %v157 = vpack.c.b16 %v143, %v142
    %v158 = vpack.c.b16 %v145, %v144
    %v159 = vpack.c.b16 %v147, %v146
    %v160 = vpack.c.b16 %v149, %v148
    %v161 = vpack.c.b16 %v151, %v150
    %v162 = vpack.c.b16 %v153, %v152
    %v163 = vpack.c.b16 %v155, %v154
    %172 = vmatpush.bf16.msra.mxu0 %v163
    %173 = vmatpush.bf16.msra.mxu0 %v162
    %174 = vmatpush.bf16.msra.mxu0 %v161
    %175 = vmatpush.bf16.msra.mxu0 %v160
    %176 = vmatpush.bf16.msra.mxu0 %v159
    %177 = vmatpush.bf16.msra.mxu0 %v158
    %178 = vmatpush.bf16.msra.mxu0 %v157
    %179 = vmatpush.bf16.msra.mxu0 %v156
    %180 = vmatmul.bf16.gmra.mxu0 %v108
    %v181 = vpop.f32.mrf.mxu0
    %v182 = vadd.f32 0.0, %v181
    %v183 = vpop.f32.mrf.mxu0
    %v184 = vadd.f32 0.0, %v183
    %185 = vmatmul.bf16.gmra.mxu0 %v109
    %v186 = vpop.f32.mrf.mxu0
    %v187 = vadd.f32 0.0, %v186
    %v188 = vpop.f32.mrf.mxu0
    %v189 = vadd.f32 0.0, %v188
    %190 = vmatmul.bf16.gmra.mxu0 %v110
    %v191 = vpop.f32.mrf.mxu0
    %v192 = vadd.f32 0.0, %v191
    %v193 = vpop.f32.mrf.mxu0
    %v194 = vadd.f32 0.0, %v193
    %195 = vmatmul.bf16.gmra.mxu0 %v111
    %v196 = vpop.f32.mrf.mxu0
    %v197 = vadd.f32 0.0, %v196
    %v198 = vpop.f32.mrf.mxu0
    %v199 = vadd.f32 0.0, %v198
    %200 = vmatmul.bf16.gmra.mxu0 %v112
    %v201 = vpop.f32.mrf.mxu0
    %v202 = vadd.f32 0.0, %v201
    %v203 = vpop.f32.mrf.mxu0
    %v204 = vadd.f32 0.0, %v203
    %205 = vmatmul.bf16.gmra.mxu0 %v113
    %v206 = vpop.f32.mrf.mxu0
    %v207 = vadd.f32 0.0, %v206
    %v208 = vpop.f32.mrf.mxu0
    %v209 = vadd.f32 0.0, %v208
    %210 = vmatmul.bf16.gmra.mxu0 %v114
    %v211 = vpop.f32.mrf.mxu0
    %v212 = vadd.f32 0.0, %v211
    %v213 = vpop.f32.mrf.mxu0
    %v214 = vadd.f32 0.0, %v213
    %215 = vmatmul.bf16.gmra.mxu0 %v115
    %v216 = vpop.f32.mrf.mxu0
    %v217 = vadd.f32 0.0, %v216
    %v218 = vpop.f32.mrf.mxu0
    %v219 = vadd.f32 0.0, %v218
    %220 = vdwg.mxu0
    %v221 = vpack.c.bf16 %v182, %v182
    %v222 = vpack.c.bf16 %v184, %v184
    %v223 = vpack.c.bf16 %v187, %v187
    %v224 = vpack.c.bf16 %v189, %v189
    %v225 = vpack.c.bf16 %v192, %v192
    %v226 = vpack.c.bf16 %v194, %v194
    %v227 = vpack.c.bf16 %v197, %v197
    %v228 = vpack.c.bf16 %v199, %v199
    %v229 = vpack.c.bf16 %v202, %v202
    %v230 = vpack.c.bf16 %v204, %v204
    %v231 = vpack.c.bf16 %v207, %v207
    %v232 = vpack.c.bf16 %v209, %v209
    %v233 = vpack.c.bf16 %v212, %v212
    %v234 = vpack.c.bf16 %v214, %v214
    %v235 = vpack.c.bf16 %v217, %v217
    %v236 = vpack.c.bf16 %v219, %v219
    %237 = vst [vmem:[#allocation7] sm:$0xf] %v221
    %238 = vst [vmem:[#allocation7 + $0x4] sm:$0xf] %v222
    %239 = vst [vmem:[#allocation7 + $0x8] sm:$0xf] %v223
    %240 = vst [vmem:[#allocation7 + $0xc] sm:$0xf] %v224
    %241 = vst [vmem:[#allocation7 + $0x10] sm:$0xf] %v225
    %242 = vst [vmem:[#allocation7 + $0x14] sm:$0xf] %v226
    %243 = vst [vmem:[#allocation7 + $0x18] sm:$0xf] %v227
    %244 = vst [vmem:[#allocation7 + $0x1c] sm:$0xf] %v228
    %245 = vst [vmem:[#allocation7 + $0x20] sm:$0xf] %v229
    %246 = vst [vmem:[#allocation7 + $0x24] sm:$0xf] %v230
    %247 = vst [vmem:[#allocation7 + $0x28] sm:$0xf] %v231
    %248 = vst [vmem:[#allocation7 + $0x2c] sm:$0xf] %v232
    %249 = vst [vmem:[#allocation7 + $0x30] sm:$0xf] %v233
    %250 = vst [vmem:[#allocation7 + $0x34] sm:$0xf] %v234
    %251 = vst [vmem:[#allocation7 + $0x38] sm:$0xf] %v235
    %252 = vst [vmem:[#allocation7 + $0x3c] sm:$0xf] %v236
    // Predicated region
    $region18: #{tpu_custom_call.1} parent=1 // pred_check
      _
    $region19: #{tpu_custom_call.1} parent=1 // pred_check_branch
      %254 = sbr.rel (0) target = $region21
    $region20: #{tpu_custom_call.1} parent=1 // pred_region
      %256 = vsyncadd [#allocation4], 0
      %s257 = sshll.u32 [#allocation7], 4
      %s258 = int_to_ptr.vmem [resolvable:$true] %s257
      %s259 = sshll.u32 %s2, 4
      %s260 = int_to_ptr.hbm [resolvable:$true] %s259
      %265 = dma.vmem_to_hbm [thread:$0]  %s258, 1024, %s260, [#allocation4], 64, 64, 4
    $region21: #{tpu_custom_call.1} parent=1 // pred_fallthru
      _
    // Predicated region
    $region22: #{tpu_custom_call.1} parent=1 // pred_check
      _
    $region23: #{tpu_custom_call.1} parent=1 // pred_check_branch
      %267 = sbr.rel (0) target = $region25
    $region24: #{tpu_custom_call.1} parent=1 // pred_region
      %269 = dma.done [#allocation4], 1024
    $region25: #{tpu_custom_call.1} parent=1 // pred_fallthru
      _
    %270 = vsyncpa [#allocation3], 1
    %271 = vsyncpa [#allocation6], 1
    %272 = vsyncpa [#allocation4], 1

</llo_original>
